<compile_context>
chip_gen: v5e
topology: v5e:2x2
jax: 0.10.0
libtpu: 0.0.40
codegen_flags: <defaults>
</compile_context>

<pallas_src>
import functools

import jax
import jax.numpy as jnp
from jax.experimental import pallas as pl
from jax.experimental.pallas import tpu as pltpu


# ------------------------------ helpers (in-kernel) ------------------------------

def _ln(x, g, b):
    mu = jnp.mean(x, axis=-1, keepdims=True)
    var = jnp.mean(jnp.square(x - mu), axis=-1, keepdims=True)
    return (x - mu) * jax.lax.rsqrt(var + 1e-5) * g + b


# ------------------------------ patch embed kernel ------------------------------

def _patch_embed_kernel(xp_ref, w_ref, b_ref, pos_ref, o_ref):
    # xp: (N, pdim) f32, w: (pdim, hid) bf16, b/pos: f32 -> tokens + pos_embed (fused).
    t = jnp.dot(xp_ref[...].astype(jnp.bfloat16), w_ref[...],
                preferred_element_type=jnp.float32)
    o_ref[...] = t + b_ref[...] + pos_ref[...]


def patch_embed(xp, w, b, pos, *, B, N):
    BN, pdim = xp.shape
    hid = w.shape[1]
    return pl.pallas_call(
        _patch_embed_kernel,
        out_shape=jax.ShapeDtypeStruct((BN, hid), jnp.float32),
        grid=(B,),
        in_specs=[
            pl.BlockSpec((N, pdim), lambda i: (i, 0)),
            pl.BlockSpec((pdim, hid), lambda i: (0, 0)),
            pl.BlockSpec((1, hid), lambda i: (0, 0)),
            pl.BlockSpec((N, hid), lambda i: (0, 0)),
        ],
        out_specs=pl.BlockSpec((N, hid), lambda i: (i, 0)),
        compiler_params=pltpu.CompilerParams(dimension_semantics=("parallel",)),
    )(xp, w, b, pos)


# ------------------------------ fused encoder layer ------------------------------

def _layer_kernel(x_ref, ln1_g_ref, ln1_b_ref, wqkv_ref, bqkv_ref,
                  wproj_ref, bproj_ref, ln2_g_ref, ln2_b_ref,
                  fc1_w_ref, fc1_b_ref, fc2_w_ref, fc2_b_ref, o_ref, *, nh, dh):
    """One full transformer layer for one batch element; x: (N, hid) f32 resident in VMEM."""
    bf16 = jnp.bfloat16
    x = x_ref[...]                                            # (N, hid) f32

    # ---- multi-head self attention (pre-norm), residual fused ----
    h = _ln(x, ln1_g_ref[...], ln1_b_ref[...])
    h_bf = h.astype(bf16)
    scale = 1.0 / float(dh) ** 0.5
    rhs_t = (((1,), (1,)), ((), ()))                          # contract lhs.-1 with rhs.-1

    acc = None
    for head in range(nh):
        # per-head weights laid out (head-major, dh, hid): index major axis only.
        q = jax.lax.dot_general(h_bf, wqkv_ref[head], rhs_t,
                                preferred_element_type=jnp.float32) + bqkv_ref[head]
        k = jax.lax.dot_general(h_bf, wqkv_ref[nh + head], rhs_t,
                                preferred_element_type=jnp.float32) + bqkv_ref[nh + head]
        v = jax.lax.dot_general(h_bf, wqkv_ref[2 * nh + head], rhs_t,
                                preferred_element_type=jnp.float32) + bqkv_ref[2 * nh + head]

        s = jax.lax.dot_general(q.astype(bf16), k.astype(bf16), rhs_t,
                                preferred_element_type=jnp.float32) * scale   # (N, N)
        m = jnp.max(s, axis=-1, keepdims=True)
        p = jnp.exp(s - m)
        p = p * pl.reciprocal(jnp.sum(p, axis=-1, keepdims=True), approx=True)
        o_h = jnp.dot(p.astype(bf16), v.astype(bf16),
                      preferred_element_type=jnp.float32)                     # (N, dh)
        contrib = jnp.dot(o_h.astype(bf16), wproj_ref[head],
                          preferred_element_type=jnp.float32)                 # (N, hid)
        acc = contrib if acc is None else acc + contrib

    x = x + acc + bproj_ref[...]                              # residual (fused)

    # ---- MLP (pre-norm), residual fused ----
    h2 = _ln(x, ln2_g_ref[...], ln2_b_ref[...])
    u = jnp.dot(h2.astype(bf16), fc1_w_ref[...],
                preferred_element_type=jnp.float32) + fc1_b_ref[...]
    u = jax.nn.gelu(u, approximate=True)
    x = x + jnp.dot(u.astype(bf16), fc2_w_ref[...],
                    preferred_element_type=jnp.float32) + fc2_b_ref[...]

    o_ref[...] = x


def encoder_layer(x, layer, *, B, N, nh, dh):
    BN, hid = x.shape
    mlp = layer["fc1_w"].shape[1]

    def full(shape):
        return pl.BlockSpec(shape, lambda i, _s=shape: (0,) * len(_s))

    return pl.pallas_call(
        functools.partial(_layer_kernel, nh=nh, dh=dh),
        out_shape=jax.ShapeDtypeStruct((BN, hid), jnp.float32),
        grid=(B,),
        in_specs=[
            pl.BlockSpec((N, hid), lambda i: (i, 0)),   # activation slab
            full((1, hid)), full((1, hid)),             # ln1 gamma/beta
            full((3 * nh, dh, hid)),                    # qkv weights, head-major, bf16
            full((3 * nh, 1, dh)),                      # qkv biases, head-major
            full((nh, dh, hid)),                        # proj weights, head-major, bf16
            full((1, hid)),                             # proj bias
            full((1, hid)), full((1, hid)),             # ln2 gamma/beta
            full((hid, mlp)), full((1, mlp)),           # fc1 (bf16) + bias
            full((mlp, hid)), full((1, hid)),           # fc2 (bf16) + bias
        ],
        out_specs=pl.BlockSpec((N, hid), lambda i: (i, 0)),
        compiler_params=pltpu.CompilerParams(
            dimension_semantics=("parallel",),          # shards batch across v7x's 2 TCs
            vmem_limit_bytes=48 * 1024 * 1024),         # bf16 weights x2 buf ~28 MB < 48 MiB < v7x 64 MiB
    )(x, layer["ln1_g"], layer["ln1_b"], layer["wqkv_h"], layer["bqkv_h"],
      layer["wproj_h"], layer["proj_b"], layer["ln2_g"], layer["ln2_b"],
      layer["fc1_w"], layer["fc1_b"], layer["fc2_w"], layer["fc2_b"])


# ------------------------------ head: Linear -> mean -> CE ------------------------------

def _head_kernel(x_ref, w_ref, b_ref, y_ref, pred_ref, loss_ref, *, B, N):
    logits = jnp.dot(x_ref[...].astype(jnp.bfloat16), w_ref[...],
                     preferred_element_type=jnp.float32) + b_ref[...]      # (B*N, C)
    C = logits.shape[-1]
    pred = jnp.mean(logits.reshape(B, N, C), axis=1)                       # torch.mean(dim=1)
    pred_ref[...] = pred
    # CrossEntropyLoss (mean over batch) of pred vs one-hot labels.
    m = jnp.max(pred, axis=-1, keepdims=True)
    lse = jnp.log(jnp.sum(jnp.exp(pred - m), axis=-1, keepdims=True)) + m
    tgt = jnp.sum(pred * y_ref[...], axis=-1, keepdims=True)
    loss_ref[...] = jnp.mean(lse - tgt, keepdims=True)                     # (1, 1)


def head_linear_mean_ce(feats, w, b, y_onehot, *, B, N):
    BN, hid = feats.shape
    C = w.shape[1]
    pred, loss = pl.pallas_call(
        functools.partial(_head_kernel, B=B, N=N),
        out_shape=(jax.ShapeDtypeStruct((B, C), jnp.float32),
                   jax.ShapeDtypeStruct((1, 1), jnp.float32)),
        grid=(1,),
        in_specs=[
            pl.BlockSpec((BN, hid), lambda i: (0, 0)),
            pl.BlockSpec((hid, C), lambda i: (0, 0)),
            pl.BlockSpec((1, C), lambda i: (0, 0)),
            pl.BlockSpec((B, C), lambda i: (0, 0)),
        ],
        out_specs=(pl.BlockSpec((B, C), lambda i: (0, 0)),
                   pl.BlockSpec((1, 1), lambda i: (0, 0))),
    )(feats, w, b, y_onehot)
    return pred, loss[0, 0]


# ------------------------------ model (glue) ------------------------------

def unetr_transformer_features(x_vol, params, cfg):
    """Simplified UNETR_base_3DNet encoder: returns (B*N_tokens, 768) token features."""
    B, Cin, D, H, W = x_vol.shape
    p = cfg["patch"]
    Dp, Hp, Wp = D // p, H // p, W // p
    N = Dp * Hp * Wp
    hid, nh = cfg["hidden"], cfg["heads"]
    dh = hid // nh

    # Patchify matching Conv3d(kernel=stride=p) flatten order (C, kd, kh, kw). One-time glue.
    xp = x_vol.reshape(B, Cin, Dp, p, Hp, p, Wp, p)
    xp = xp.transpose(0, 2, 4, 6, 1, 3, 5, 7).reshape(B * N, Cin * p * p * p)

    x = patch_embed(xp, params["patch_w"], params["patch_b"], params["pos_embed"],
                    B=B, N=N)                                      # pos-embed add fused
    for layer in params["layers"]:
        x = encoder_layer(x, layer, B=B, N=N, nh=nh, dh=dh)        # one kernel per layer
    return x                                                        # (B*N, hid)


def transformer_3dnet_forward(X, y, params, cfg):
    """Mirrors transformer_3DNet.forward(X, y) -> (final_pred, loss)."""
    B = X[1].shape[0]
    N = (cfg["img"] // cfg["patch"]) ** 3
    feats = unetr_transformer_features(X[1], params, cfg)           # features_3D[0]
    y_onehot = jax.nn.one_hot(y, cfg["classes"], dtype=jnp.float32)
    final_pred, loss = head_linear_mean_ce(feats, params["fc_w"], params["fc_b"],
                                           y_onehot, B=B, N=N)
    return final_pred, loss


# ------------------------------ parameter init ------------------------------

def init_params(key, cfg):
    hid, mlp, C, nh = cfg["hidden"], cfg["mlp"], cfg["classes"], cfg["heads"]
    dh = hid // nh
    pdim = cfg["in_channels"] * cfg["patch"] ** 3
    N = (cfg["img"] // cfg["patch"]) ** 3

    def nrm(k, shape, s=0.02):
        return (s * jax.random.normal(k, shape)).astype(jnp.float32)

    keys = iter(jax.random.split(key, 8 + 8 * cfg["layers"]))
    params = {
        "patch_w": nrm(next(keys), (pdim, hid)).astype(jnp.bfloat16),
        "patch_b": jnp.zeros((1, hid), jnp.float32),
        "pos_embed": nrm(next(keys), (N, hid)),
        "fc_w": nrm(next(keys), (hid, C)).astype(jnp.bfloat16),     # Linear(768, classes)
        "fc_b": jnp.zeros((1, C), jnp.float32),
        "layers": [],
    }
    for _ in range(cfg["layers"]):
        qkv_w = nrm(next(keys), (hid, 3 * hid))
        proj_w = nrm(next(keys), (hid, hid))
        # Head-major layouts: kernel only indexes the leading axis (no lane slicing).
        wqkv_h = (qkv_w.reshape(hid, 3, nh, dh)
                  .transpose(1, 2, 3, 0)                            # (3, nh, dh, hid)
                  .reshape(3 * nh, dh, hid)
                  .astype(jnp.bfloat16))
        wproj_h = proj_w.reshape(nh, dh, hid).astype(jnp.bfloat16)
        params["layers"].append({
            "ln1_g": jnp.ones((1, hid), jnp.float32),
            "ln1_b": jnp.zeros((1, hid), jnp.float32),
            "wqkv_h": wqkv_h,
            "bqkv_h": jnp.zeros((3 * nh, 1, dh), jnp.float32),
            "wproj_h": wproj_h,
            "proj_b": jnp.zeros((1, hid), jnp.float32),
            "ln2_g": jnp.ones((1, hid), jnp.float32),
            "ln2_b": jnp.zeros((1, hid), jnp.float32),
            "fc1_w": nrm(next(keys), (hid, mlp)).astype(jnp.bfloat16),
            "fc1_b": jnp.zeros((1, mlp), jnp.float32),
            "fc2_w": nrm(next(keys), (mlp, hid)).astype(jnp.bfloat16),
            "fc2_b": jnp.zeros((1, hid), jnp.float32),
        })
    return params


# ---------------------------------- main ----------------------------------

if __name__ == "__main__":
    cfg = dict(classes=4, in_channels=4, img=8, patch=4,
               hidden=768, heads=12, mlp=3072, layers=2)

    key = jax.random.PRNGKey(0)
    kx0, kx1, ky = jax.random.split(key, 3)
    B = 2
    # X is a list of modalities; only X[1] (the 3D volume, NCDHW) is used.
    x0 = jax.random.normal(kx0, (B, 16), jnp.float32)                         # unused modality
    x1 = jax.random.normal(kx1, (B, cfg["in_channels"], 8, 8, 8), jnp.float32)
    y = jax.random.randint(ky, (B,), 0, cfg["classes"], jnp.int32)

    params = init_params(jax.random.PRNGKey(1), cfg)

    final_pred, loss = transformer_3dnet_forward([x0, x1], y, params, cfg)
    jax.block_until_ready((final_pred, loss))

    assert final_pred.shape == (B, cfg["classes"])
    assert loss.shape == ()
    print("KERNEL_OK")
</pallas_src>

<mosaic_0001>
module attributes {stable_mosaic.version = 11 : i64} {
  func.func @_patch_embed_kernel(%arg0: i32, %arg1: memref<8x256xf32, #tpu.memory_space<vmem>>, %arg2: memref<256x768xbf16, #tpu.memory_space<vmem>>, %arg3: memref<1x768xf32, #tpu.memory_space<vmem>>, %arg4: memref<8x768xf32, #tpu.memory_space<vmem>>, %arg5: memref<8x768xf32, #tpu.memory_space<vmem>>) attributes {dimension_semantics = [#tpu.dimension_semantics<parallel>], iteration_bounds = array<i64: 2>, scalar_prefetch = 0 : i64, scratch_operands = 0 : i64, tpu.core_type = #tpu.core_type<tc>, window_params = [{transform_indices = @transform_0, window_bounds = array<i64: 8, 256>}, {pipeline_mode = #tpu.pipeline_mode<synchronous>, transform_indices = @transform_1, window_bounds = array<i64: 256, 768>}, {pipeline_mode = #tpu.pipeline_mode<synchronous>, transform_indices = @transform_2, window_bounds = array<i64: 1, 768>}, {pipeline_mode = #tpu.pipeline_mode<synchronous>, transform_indices = @transform_3, window_bounds = array<i64: 8, 768>}, {transform_indices = @transform_4, window_bounds = array<i64: 8, 768>}]} {
    %c0 = arith.constant 0 : index
    %c0_0 = arith.constant 0 : index
    %0 = vector.load %arg1[%c0, %c0_0] : memref<8x256xf32, #tpu.memory_space<vmem>>, vector<8x256xf32>
    %1 = arith.truncf %0 : vector<8x256xf32> to vector<8x256xbf16>
    %c0_1 = arith.constant 0 : index
    %c0_2 = arith.constant 0 : index
    %2 = vector.load %arg2[%c0_1, %c0_2] : memref<256x768xbf16, #tpu.memory_space<vmem>>, vector<256x768xbf16>
    %cst = arith.constant dense<0.000000e+00> : vector<8x768xf32>
    %3 = tpu.matmul %1, %2, %cst {dimension_numbers = #tpu.dot_dimension_numbers<[1], [0], [0], [1], [0, 0, 1, 1], [], []>} : vector<8x256xbf16>, vector<256x768xbf16>, vector<8x768xf32> -> vector<8x768xf32>
    %c0_3 = arith.constant 0 : index
    %c0_4 = arith.constant 0 : index
    %4 = vector.load %arg3[%c0_3, %c0_4] : memref<1x768xf32, #tpu.memory_space<vmem>>, vector<1x768xf32>
    %5 = vector.broadcast %4 : vector<1x768xf32> to vector<8x768xf32>
    %6 = arith.addf %3, %5 : vector<8x768xf32>
    %c0_5 = arith.constant 0 : index
    %c0_6 = arith.constant 0 : index
    %7 = vector.load %arg4[%c0_5, %c0_6] : memref<8x768xf32, #tpu.memory_space<vmem>>, vector<8x768xf32>
    %8 = arith.addf %6, %7 : vector<8x768xf32>
    %c0_7 = arith.constant 0 : index
    %c0_8 = arith.constant 0 : index
    %9 = vector.load %arg5[%c0_7, %c0_8] : memref<8x768xf32, #tpu.memory_space<vmem>>, vector<8x768xf32>
    tpu.vector_store %arg5[%c0_7, %c0_8], %8 {strides = array<i32>} : memref<8x768xf32, #tpu.memory_space<vmem>>, vector<8x768xf32>,
    return
  }
  func.func @transform_0(%arg0: i32) -> (i32, i32) {
    %c0_i32 = arith.constant 0 : i32
    %c0_i32_0 = arith.constant 0 : i32
    return %arg0, %c0_i32 : i32, i32
  }
  func.func @transform_1(%arg0: i32) -> (i32, i32) {
    %c0_i32 = arith.constant 0 : i32
    %c0_i32_0 = arith.constant 0 : i32
    %c0_i32_1 = arith.constant 0 : i32
    return %c0_i32, %c0_i32_0 : i32, i32
  }
  func.func @transform_2(%arg0: i32) -> (i32, i32) {
    %c0_i32 = arith.constant 0 : i32
    %c0_i32_0 = arith.constant 0 : i32
    %c0_i32_1 = arith.constant 0 : i32
    return %c0_i32, %c0_i32_0 : i32, i32
  }
  func.func @transform_3(%arg0: i32) -> (i32, i32) {
    %c0_i32 = arith.constant 0 : i32
    %c0_i32_0 = arith.constant 0 : i32
    %c0_i32_1 = arith.constant 0 : i32
    return %c0_i32, %c0_i32_0 : i32, i32
  }
  func.func @transform_4(%arg0: i32) -> (i32, i32) {
    %c0_i32 = arith.constant 0 : i32
    %c0_i32_0 = arith.constant 0 : i32
    return %arg0, %c0_i32 : i32, i32
  }
}

</mosaic_0001>

<llo_original>
// kernel: tpu_custom_call.1
$region0: #{tpu_custom_call.1}
  #allocation0 [shape = 'u32[]', space=smem, size = 0x4, offset = 0x4, fixed_abs, tag = 'smem constant byte address 0x4 - core index']
  #allocation1 [shape = 'u32[72,128]{1,0:T(1,128)}', space=vmem, size = 0x9000, scoped, tag = 'internal scratch']
  %s0 = inlined_call_operand.hbm [shape: f32[16,256], index: 0, kind: input, shape index: {}]
  %s1 = inlined_call_operand.hbm [shape: bf16[256,768], index: 1, kind: input, shape index: {}]
  %s2 = inlined_call_operand.hbm [shape: f32[1,768], index: 2, kind: input, shape index: {}]
  %s3 = inlined_call_operand.hbm [shape: f32[8,768], index: 3, kind: input, shape index: {}]
  %s4 = inlined_call_operand.hbm [shape: f32[16,768], index: 4, kind: output, shape index: {}]
  %s5 = sld [smem:[#allocation0]]
  $region65: #{tpu_custom_call.1} parent=0
    _
  %s7 = ssub.s32 1, %s5
  %s8 = scalar_select 0, %s7, %s5
  $region1: #{tpu_custom_call.1} parent=0
    #allocation2 [shape = 'u8[16384]{0}', space=vmem, size = 0x4000, scoped, tag = 'input window, operand 0']
    #allocation3 [shape = 's32[2]{0}', space=sflag, size = 0x8, scoped, tag = 'scoped memory for tpu_custom_call.1']
    #allocation4 [shape = 's32[2]{0}', space=sflag, size = 0x8, scoped, tag = 'scoped memory for tpu_custom_call.1']
    #allocation5 [shape = 'u8[393216]{0}', space=vmem, size = 0x60000, scoped, tag = 'input window, operand 1, single buffered']
    #allocation6 [shape = 's32[1]{0}', space=sflag, size = 0x4, scoped, tag = 'scoped memory for tpu_custom_call.1']
    #allocation7 [shape = 'u8[3072]{0}', space=vmem, size = 0xc00, scoped, tag = 'input window, operand 2, single buffered']
    #allocation8 [shape = 'u8[24576]{0}', space=vmem, size = 0x6000, scoped, tag = 'input window, operand 3, single buffered']
    #allocation9 [shape = 's32[1]{0}', space=sflag, size = 0x4, scoped, tag = 'scoped memory for tpu_custom_call.1']
    #allocation10 [shape = 'u8[49152]{0}', space=vmem, size = 0xc000, scoped, tag = 'output window, operand 0']
    %9 = vsyncpa [#allocation3], 0
    %s10 = scalar_lea.sflag [#allocation3], 1
    %11 = vsyncpa %s10, 0
    %12 = vsyncpa [#allocation6], 0
    %13 = vsyncpa [#allocation9], 0
    %14 = vsyncpa [#allocation4], 0
    %s15 = scalar_lea.sflag [#allocation4], 1
    %16 = vsyncpa %s15, 0
    loop: start=0, step=1, limit=4
    $region2: #{tpu_custom_call.1} parent=1 // loop_pre_header
      _
    $region3: #{tpu_custom_call.1} parent=1 // loop_header
      %s18 = sphi 0, %s22
      %p19 = scmp.ge.s32.totalorder %s18, 4
      %s28 = sphi 0, %s30
      %s31 = sphi 0, %s28
      %s32 = sphi 0, %s31
      %s48 = sphi 0, %s32
      %s52 = sphi 0, %s52
      %s54 = sphi 0, %s52
      %s55 = sphi 0, %s54
      %s69 = sphi 0, %s55
      %s73 = sphi 0, %s73
      %s75 = sphi 0, %s73
      %s76 = sphi 0, %s75
      %s90 = sphi 0, %s76
      %s94 = sphi 0, %s94
      %s96 = sphi 0, %s94
      %s97 = sphi 0, %s96
      %s111 = sphi 0, %s97
      %s117 = sphi 0, %s119
      %s120 = sphi 0, %s117
      %s121 = sphi 0, %s120
      %s137 = sphi 0, %s121
    $region4: #{tpu_custom_call.1} parent=1 // loop_header_branch
      %21 = sbr.rel (%p19) target = $region8
    $region5: #{tpu_custom_call.1} parent=1 // loop_body
      %s23 = ssub.s32 %s18, 1
      %s24 = ssub.s32 %s18, 2
      %s25 = sadd.s32 %s18, 1
      %s26 = ssub.s32 %s18, %s25
      %p27 = scmp.eq.s32.totalorder %s26, 0
      %s29 = sadd.s32 %s28, 1
      %s30 = scalar_select %p27, %s28, %s29
      %p33 = pneg %p27
      %p34 = scmp.eq.s32.totalorder %s18, 1
      %p35 = por %p33, %p34
      %p36 = scmp.ne.s32.totalorder %s28, %s31
      %p37 = scmp.eq.s32.totalorder %s18, 0
      %p38 = por %p36, %p37
      %p39 = scmp.ne.s32.totalorder %s28, %s31
      %p40 = scmp.eq.s32.totalorder %s23, 1
      %p41 = por %p39, %p40
      %p42 = scmp.ne.s32.totalorder %s31, %s32
      %p43 = scmp.eq.s32.totalorder %s23, 0
      %p44 = por %p42, %p43
      %p45 = scmp.ne.s32.totalorder %s31, %s32
      %p46 = scmp.eq.s32.totalorder %s24, 1
      %p47 = por %p45, %p46
      %p49 = scmp.ne.s32.totalorder %s32, %s48
      %p50 = scmp.eq.s32.totalorder %s24, 0
      %p51 = por %p49, %p50
      %s53 = sadd.s32 %s52, 1
      %p56 = scmp.eq.s32.totalorder %s18, 1
      %p57 = scmp.ne.s32.totalorder %s52, %s54
      %p58 = scmp.eq.s32.totalorder %s18, 0
      %p59 = por %p57, %p58
      %p60 = scmp.ne.s32.totalorder %s52, %s54
      %p61 = scmp.eq.s32.totalorder %s23, 1
      %p62 = por %p60, %p61
      %p63 = scmp.ne.s32.totalorder %s54, %s55
      %p64 = scmp.eq.s32.totalorder %s23, 0
      %p65 = por %p63, %p64
      %p66 = scmp.ne.s32.totalorder %s54, %s55
      %p67 = scmp.eq.s32.totalorder %s24, 1
      %p68 = por %p66, %p67
      %p70 = scmp.ne.s32.totalorder %s55, %s69
      %p71 = scmp.eq.s32.totalorder %s24, 0
      %p72 = por %p70, %p71
      %s74 = sadd.s32 %s73, 1
      %p77 = scmp.eq.s32.totalorder %s18, 1
      %p78 = scmp.ne.s32.totalorder %s73, %s75
      %p79 = scmp.eq.s32.totalorder %s18, 0
      %p80 = por %p78, %p79
      %p81 = scmp.ne.s32.totalorder %s73, %s75
      %p82 = scmp.eq.s32.totalorder %s23, 1
      %p83 = por %p81, %p82
      %p84 = scmp.ne.s32.totalorder %s75, %s76
      %p85 = scmp.eq.s32.totalorder %s23, 0
      %p86 = por %p84, %p85
      %p87 = scmp.ne.s32.totalorder %s75, %s76
      %p88 = scmp.eq.s32.totalorder %s24, 1
      %p89 = por %p87, %p88
      %p91 = scmp.ne.s32.totalorder %s76, %s90
      %p92 = scmp.eq.s32.totalorder %s24, 0
      %p93 = por %p91, %p92
      %s95 = sadd.s32 %s94, 1
      %p98 = scmp.eq.s32.totalorder %s18, 1
      %p99 = scmp.ne.s32.totalorder %s94, %s96
      %p100 = scmp.eq.s32.totalorder %s18, 0
      %p101 = por %p99, %p100
      %p102 = scmp.ne.s32.totalorder %s94, %s96
      %p103 = scmp.eq.s32.totalorder %s23, 1
      %p104 = por %p102, %p103
      %p105 = scmp.ne.s32.totalorder %s96, %s97
      %p106 = scmp.eq.s32.totalorder %s23, 0
      %p107 = por %p105, %p106
      %p108 = scmp.ne.s32.totalorder %s96, %s97
      %p109 = scmp.eq.s32.totalorder %s24, 1
      %p110 = por %p108, %p109
      %p112 = scmp.ne.s32.totalorder %s97, %s111
      %p113 = scmp.eq.s32.totalorder %s24, 0
      %p114 = por %p112, %p113
      %s115 = ssub.s32 %s18, %s25
      %p116 = scmp.eq.s32.totalorder %s115, 0
      %s118 = sadd.s32 %s117, 1
      %s119 = scalar_select %p116, %s117, %s118
      %p122 = pneg %p116
      %p123 = scmp.eq.s32.totalorder %s18, 1
      %p124 = por %p122, %p123
      %p125 = scmp.ne.s32.totalorder %s117, %s120
      %p126 = scmp.eq.s32.totalorder %s18, 0
      %p127 = por %p125, %p126
      %p128 = scmp.ne.s32.totalorder %s117, %s120
      %p129 = scmp.eq.s32.totalorder %s23, 1
      %p130 = por %p128, %p129
      %p131 = scmp.ne.s32.totalorder %s120, %s121
      %p132 = scmp.eq.s32.totalorder %s23, 0
      %p133 = por %p131, %p132
      %p134 = scmp.ne.s32.totalorder %s120, %s121
      %p135 = scmp.eq.s32.totalorder %s24, 1
      %p136 = por %p134, %p135
      %p138 = scmp.ne.s32.totalorder %s121, %s137
      %p139 = scmp.eq.s32.totalorder %s24, 0
      %p140 = por %p138, %p139
      %p141 = scmp.le.s32.totalorder 1, %s18
      %p142 = scmp.lt.s32.totalorder %s18, 3
      %p143 = pnand %p141, %p142
      %p144 = pneg %p143
      // Predicated region
      $region9: #{tpu_custom_call.1} parent=5 // pred_check
        _
      $region10: #{tpu_custom_call.1} parent=5 // pred_check_branch
        %146 = sbr.rel (%p143) target = $region12
      $region11: #{tpu_custom_call.1} parent=5 // pred_region
        %s147 = ssub.s32 %s18, 1
        // Predicated region
        $region13: #{tpu_custom_call.1} parent=11 // pred_check
          %p148 = pneg %p65
        $region14: #{tpu_custom_call.1} parent=11 // pred_check_branch
          %150 = sbr.rel (%p148) target = $region16
        $region15: #{tpu_custom_call.1} parent=11 // pred_region
          %152 = vsyncadd [#allocation6], 0
          %s153 = sshll.u32 %s1, 4
          %s154 = int_to_ptr.hbm [resolvable:$true] %s153
          %s155 = sshll.u32 [#allocation5], 4
          %s156 = int_to_ptr.vmem [resolvable:$true] %s155
          %161 = dma.hbm_to_vmem [thread:$0]  %s154, 12288, %s156, [#allocation6], 384, 384, 24
        $region16: #{tpu_custom_call.1} parent=11 // pred_fallthru
          _
        // Predicated region
        $region17: #{tpu_custom_call.1} parent=11 // pred_check
          %p162 = pneg %p86
        $region18: #{tpu_custom_call.1} parent=11 // pred_check_branch
          %164 = sbr.rel (%p162) target = $region20
        $region19: #{tpu_custom_call.1} parent=11 // pred_region
          %166 = vsyncadd [#allocation6], 0
          %s168 = sshll.u32 %s2, 4
          %s169 = int_to_ptr.hbm [resolvable:$true] %s168
          %s170 = sshll.u32 [#allocation7], 4
          %s171 = int_to_ptr.vmem [resolvable:$true] %s170
          %173 = dma.hbm_to_vmem [thread:$0]  %s169, 96, %s171, [#allocation6]
        $region20: #{tpu_custom_call.1} parent=11 // pred_fallthru
          _
        // Predicated region
        $region21: #{tpu_custom_call.1} parent=11 // pred_check
          %p174 = pneg %p107
        $region22: #{tpu_custom_call.1} parent=11 // pred_check_branch
          %176 = sbr.rel (%p174) target = $region24
        $region23: #{tpu_custom_call.1} parent=11 // pred_region
          %178 = vsyncadd [#allocation9], 0
          %s180 = sshll.u32 %s3, 4
          %s181 = int_to_ptr.hbm [resolvable:$true] %s180
          %s182 = sshll.u32 [#allocation8], 4
          %s183 = int_to_ptr.vmem [resolvable:$true] %s182
          %185 = dma.hbm_to_vmem [thread:$0]  %s181, 768, %s183, [#allocation9]
        $region24: #{tpu_custom_call.1} parent=11 // pred_fallthru
          _
      $region12: #{tpu_custom_call.1} parent=5 // pred_fallthru
        _
      %p186 = scmp.lt.s32.totalorder %s18, 2
      // Predicated region
      $region25: #{tpu_custom_call.1} parent=5 // pred_check
        %p187 = pneg %p186
      $region26: #{tpu_custom_call.1} parent=5 // pred_check_branch
        %189 = sbr.rel (%p187) target = $region28
      $region27: #{tpu_custom_call.1} parent=5 // pred_region
        // Predicated region
        $region29: #{tpu_custom_call.1} parent=27 // pred_check
          %p190 = pneg %p38
        $region30: #{tpu_custom_call.1} parent=27 // pred_check_branch
          %192 = sbr.rel (%p190) target = $region32
        $region31: #{tpu_custom_call.1} parent=27 // pred_region
          %s193 = sand.u32 %s28, 1
          %s194 = scalar_lea.sflag [#allocation3], %s193
          %s195 = sand.u32 %s28, 1
          %s196 = smul.addr %s195, 16
          %s197 = scalar_lea.vmem [#allocation2], %s196
          %199 = vsyncadd %s194, 0
          %s200 = smul.addr %s18, 2
          %s201 = smul.addr %s200, 8
          %s202 = scalar_lea.hbm %s0, %s201
          %s204 = sshll.u32 %s202, 4
          %s205 = int_to_ptr.hbm [resolvable:$true] %s204
          %s206 = sshll.u32 %s197, 4
          %s207 = int_to_ptr.vmem [resolvable:$true] %s206
          %209 = dma.hbm_to_vmem [thread:$0]  %s205, 256, %s207, %s194
        $region32: #{tpu_custom_call.1} parent=27 // pred_fallthru
          _
      $region28: #{tpu_custom_call.1} parent=5 // pred_fallthru
        _
      %p210 = scmp.le.s32.totalorder 1, %s18
      %p211 = scmp.lt.s32.totalorder %s18, 3
      %p212 = pnand %p210, %p211
      %p213 = pneg %p212
      // Predicated region
      $region33: #{tpu_custom_call.1} parent=5 // pred_check
        _
      $region34: #{tpu_custom_call.1} parent=5 // pred_check_branch
        %215 = sbr.rel (%p212) target = $region36
      $region35: #{tpu_custom_call.1} parent=5 // pred_region
        %s216 = ssub.s32 %s18, 1
        %s217 = sand.u32 %s31, 1
        %s218 = scalar_lea.sflag [#allocation3], %s217
        %s219 = sand.u32 %s31, 1
        %s220 = smul.addr %s219, 16
        %s221 = scalar_lea.vmem [#allocation2], %s220
        // Predicated region
        $region37: #{tpu_custom_call.1} parent=35 // pred_check
          %p222 = pneg %p44
        $region38: #{tpu_custom_call.1} parent=35 // pred_check_branch
          %224 = sbr.rel (%p222) target = $region40
        $region39: #{tpu_custom_call.1} parent=35 // pred_region
          %226 = dma.done %s218, 256
        $region40: #{tpu_custom_call.1} parent=35 // pred_fallthru
          _
        // Predicated region
        $region41: #{tpu_custom_call.1} parent=35 // pred_check
          %p227 = pneg %p65
        $region42: #{tpu_custom_call.1} parent=35 // pred_check_branch
          %229 = sbr.rel (%p227) target = $region44
        $region43: #{tpu_custom_call.1} parent=35 // pred_region
          %231 = dma.done [#allocation6], 12288
        $region44: #{tpu_custom_call.1} parent=35 // pred_fallthru
          _
        // Predicated region
        $region45: #{tpu_custom_call.1} parent=35 // pred_check
          %p232 = pneg %p86
        $region46: #{tpu_custom_call.1} parent=35 // pred_check_branch
          %234 = sbr.rel (%p232) target = $region48
        $region47: #{tpu_custom_call.1} parent=35 // pred_region
          %236 = dma.done [#allocation6], 96
        $region48: #{tpu_custom_call.1} parent=35 // pred_fallthru
          _
        // Predicated region
        $region49: #{tpu_custom_call.1} parent=35 // pred_check
          %p237 = pneg %p107
        $region50: #{tpu_custom_call.1} parent=35 // pred_check_branch
          %239 = sbr.rel (%p237) target = $region52
        $region51: #{tpu_custom_call.1} parent=35 // pred_region
          %241 = dma.done [#allocation9], 768
        $region52: #{tpu_custom_call.1} parent=35 // pred_fallthru
          _
        %s242 = sand.u32 %s31, 1
        %s243 = scalar_lea.sflag [#allocation3], %s242
        %s244 = sand.u32 %s31, 1
        %s245 = smul.addr %s244, 16
        %s246 = scalar_lea.vmem [#allocation2], %s245
        %p247 = pneg %p44
        %p248 = pneg %p41
        %p249 = pneg %p65
        %p250 = pneg %p62
        %p251 = pneg %p86
        %p252 = pneg %p83
        %p253 = pneg %p107
        %p254 = pneg %p104
        %p255 = pneg %p133
        %p256 = pneg %p130
        %s257 = sand.u32 %s120, 1
        %s258 = scalar_lea.sflag [#allocation4], %s257
        %s259 = sand.u32 %s120, 1
        %s260 = smul.addr %s259, 48
        %s261 = scalar_lea.vmem [#allocation10], %s260
        %v262 = vld [vmem:[%s221] sm:$0xff]
        %v263 = vld [vmem:[%s221 + $0x8] sm:$0xff]
        %v264 = vpack.c.bf16 %v262, %v262
        %v265 = vpack.c.bf16 %v263, %v263
        %v266 = vld [vmem:[#allocation5] sm:$0xff]
        %v267 = vld [vmem:[#allocation5 + $0x8] sm:$0xff]
        %v268 = vld [vmem:[#allocation5 + $0x10] sm:$0xff]
        %v269 = vld [vmem:[#allocation5 + $0x18] sm:$0xff]
        %v270 = vld [vmem:[#allocation5 + $0x20] sm:$0xff]
        %v271 = vld [vmem:[#allocation5 + $0x28] sm:$0xff]
        %v272 = vld [vmem:[#allocation5 + $0x30] sm:$0xff]
        %v273 = vld [vmem:[#allocation5 + $0x38] sm:$0xff]
        %v274 = vld [vmem:[#allocation5 + $0x40] sm:$0xff]
        %v275 = vld [vmem:[#allocation5 + $0x48] sm:$0xff]
        %v276 = vld [vmem:[#allocation5 + $0x50] sm:$0xff]
        %v277 = vld [vmem:[#allocation5 + $0x58] sm:$0xff]
        %v278 = vld [vmem:[#allocation5 + $0x60] sm:$0xff]
        %v279 = vld [vmem:[#allocation5 + $0x68] sm:$0xff]
        %v280 = vld [vmem:[#allocation5 + $0x70] sm:$0xff]
        %v281 = vld [vmem:[#allocation5 + $0x78] sm:$0xff]
        %v282 = vld [vmem:[#allocation5 + $0x80] sm:$0xff]
        %v283 = vld [vmem:[#allocation5 + $0x88] sm:$0xff]
        %v284 = vld [vmem:[#allocation5 + $0x90] sm:$0xff]
        %v285 = vld [vmem:[#allocation5 + $0x98] sm:$0xff]
        %v286 = vld [vmem:[#allocation5 + $0xa0] sm:$0xff]
        %v287 = vld [vmem:[#allocation5 + $0xa8] sm:$0xff]
        %v288 = vld [vmem:[#allocation5 + $0xb0] sm:$0xff]
        %v289 = vld [vmem:[#allocation5 + $0xb8] sm:$0xff]
        %v290 = vld [vmem:[#allocation5 + $0xc0] sm:$0xff]
        %v291 = vld [vmem:[#allocation5 + $0xc8] sm:$0xff]
        %v292 = vld [vmem:[#allocation5 + $0xd0] sm:$0xff]
        %v293 = vld [vmem:[#allocation5 + $0xd8] sm:$0xff]
        %v294 = vld [vmem:[#allocation5 + $0xe0] sm:$0xff]
        %v295 = vld [vmem:[#allocation5 + $0xe8] sm:$0xff]
        %v296 = vld [vmem:[#allocation5 + $0xf0] sm:$0xff]
        %v297 = vld [vmem:[#allocation5 + $0xf8] sm:$0xff]
        %v298 = vld [vmem:[#allocation5 + $0x100] sm:$0xff]
        %v299 = vld [vmem:[#allocation5 + $0x108] sm:$0xff]
        %v300 = vld [vmem:[#allocation5 + $0x110] sm:$0xff]
        %v301 = vld [vmem:[#allocation5 + $0x118] sm:$0xff]
        %v302 = vld [vmem:[#allocation5 + $0x120] sm:$0xff]
        %v303 = vld [vmem:[#allocation5 + $0x128] sm:$0xff]
        %v304 = vld [vmem:[#allocation5 + $0x130] sm:$0xff]
        %v305 = vld [vmem:[#allocation5 + $0x138] sm:$0xff]
        %v306 = vld [vmem:[#allocation5 + $0x140] sm:$0xff]
        %v307 = vld [vmem:[#allocation5 + $0x148] sm:$0xff]
        %v308 = vld [vmem:[#allocation5 + $0x150] sm:$0xff]
        %v309 = vld [vmem:[#allocation5 + $0x158] sm:$0xff]
        %v310 = vld [vmem:[#allocation5 + $0x160] sm:$0xff]
        %v311 = vld [vmem:[#allocation5 + $0x168] sm:$0xff]
        %v312 = vld [vmem:[#allocation5 + $0x170] sm:$0xff]
        %v313 = vld [vmem:[#allocation5 + $0x178] sm:$0xff]
        %v314 = vld [vmem:[#allocation5 + $0x180] sm:$0xff]
        %v315 = vld [vmem:[#allocation5 + $0x188] sm:$0xff]
        %v316 = vld [vmem:[#allocation5 + $0x190] sm:$0xff]
        %v317 = vld [vmem:[#allocation5 + $0x198] sm:$0xff]
        %v318 = vld [vmem:[#allocation5 + $0x1a0] sm:$0xff]
        %v319 = vld [vmem:[#allocation5 + $0x1a8] sm:$0xff]
        %v320 = vld [vmem:[#allocation5 + $0x1b0] sm:$0xff]
        %v321 = vld [vmem:[#allocation5 + $0x1b8] sm:$0xff]
        %v322 = vld [vmem:[#allocation5 + $0x1c0] sm:$0xff]
        %v323 = vld [vmem:[#allocation5 + $0x1c8] sm:$0xff]
        %v324 = vld [vmem:[#allocation5 + $0x1d0] sm:$0xff]
        %v325 = vld [vmem:[#allocation5 + $0x1d8] sm:$0xff]
        %v326 = vld [vmem:[#allocation5 + $0x1e0] sm:$0xff]
        %v327 = vld [vmem:[#allocation5 + $0x1e8] sm:$0xff]
        %v328 = vld [vmem:[#allocation5 + $0x1f0] sm:$0xff]
        %v329 = vld [vmem:[#allocation5 + $0x1f8] sm:$0xff]
        %v330 = vld [vmem:[#allocation5 + $0x200] sm:$0xff]
        %v331 = vld [vmem:[#allocation5 + $0x208] sm:$0xff]
        %v332 = vld [vmem:[#allocation5 + $0x210] sm:$0xff]
        %v333 = vld [vmem:[#allocation5 + $0x218] sm:$0xff]
        %v334 = vld [vmem:[#allocation5 + $0x220] sm:$0xff]
        %v335 = vld [vmem:[#allocation5 + $0x228] sm:$0xff]
        %v336 = vld [vmem:[#allocation5 + $0x230] sm:$0xff]
        %v337 = vld [vmem:[#allocation5 + $0x238] sm:$0xff]
        %v338 = vld [vmem:[#allocation5 + $0x240] sm:$0xff]
        %v339 = vld [vmem:[#allocation5 + $0x248] sm:$0xff]
        %v340 = vld [vmem:[#allocation5 + $0x250] sm:$0xff]
        %v341 = vld [vmem:[#allocation5 + $0x258] sm:$0xff]
        %v342 = vld [vmem:[#allocation5 + $0x260] sm:$0xff]
        %v343 = vld [vmem:[#allocation5 + $0x268] sm:$0xff]
        %v344 = vld [vmem:[#allocation5 + $0x270] sm:$0xff]
        %v345 = vld [vmem:[#allocation5 + $0x278] sm:$0xff]
        %v346 = vld [vmem:[#allocation5 + $0x280] sm:$0xff]
        %v347 = vld [vmem:[#allocation5 + $0x288] sm:$0xff]
        %v348 = vld [vmem:[#allocation5 + $0x290] sm:$0xff]
        %v349 = vld [vmem:[#allocation5 + $0x298] sm:$0xff]
        %v350 = vld [vmem:[#allocation5 + $0x2a0] sm:$0xff]
        %v351 = vld [vmem:[#allocation5 + $0x2a8] sm:$0xff]
        %v352 = vld [vmem:[#allocation5 + $0x2b0] sm:$0xff]
        %v353 = vld [vmem:[#allocation5 + $0x2b8] sm:$0xff]
        %v354 = vld [vmem:[#allocation5 + $0x2c0] sm:$0xff]
        %v355 = vld [vmem:[#allocation5 + $0x2c8] sm:$0xff]
        %v356 = vld [vmem:[#allocation5 + $0x2d0] sm:$0xff]
        %v357 = vld [vmem:[#allocation5 + $0x2d8] sm:$0xff]
        %v358 = vld [vmem:[#allocation5 + $0x2e0] sm:$0xff]
        %v359 = vld [vmem:[#allocation5 + $0x2e8] sm:$0xff]
        %v360 = vld [vmem:[#allocation5 + $0x2f0] sm:$0xff]
        %v361 = vld [vmem:[#allocation5 + $0x2f8] sm:$0xff]
        %v362 = vld [vmem:[#allocation7] sm:$0x3f]
        %v364 = vperm.slane %v362, 0
        %v365 = vperm.slane %v362, 1
        %v366 = vperm.slane %v362, 2
        %v367 = vperm.slane %v362, 3
        %v368 = vperm.slane %v362, 4
        %v369 = vperm.slane %v362, 5
        %v472 = vunpack.c.l.b16 %v266
        %v473 = vunpack.c.h.b16 %v266
        %v474 = vunpack.c.l.b16 %v267
        %v475 = vunpack.c.h.b16 %v267
        %v476 = vunpack.c.l.b16 %v268
        %v477 = vunpack.c.h.b16 %v268
        %v478 = vunpack.c.l.b16 %v269
        %v479 = vunpack.c.h.b16 %v269
        %v480 = vunpack.c.l.b16 %v270
        %v481 = vunpack.c.h.b16 %v270
        %v482 = vunpack.c.l.b16 %v271
        %v483 = vunpack.c.h.b16 %v271
        %v484 = vunpack.c.l.b16 %v272
        %v485 = vunpack.c.h.b16 %v272
        %v486 = vunpack.c.l.b16 %v273
        %v487 = vunpack.c.h.b16 %v273
        %v488 = vunpack.c.l.b16 %v274
        %v489 = vunpack.c.h.b16 %v274
        %v490 = vunpack.c.l.b16 %v275
        %v491 = vunpack.c.h.b16 %v275
        %v492 = vunpack.c.l.b16 %v276
        %v493 = vunpack.c.h.b16 %v276
        %v494 = vunpack.c.l.b16 %v277
        %v495 = vunpack.c.h.b16 %v277
        %v496 = vunpack.c.l.b16 %v278
        %v497 = vunpack.c.h.b16 %v278
        %v498 = vunpack.c.l.b16 %v279
        %v499 = vunpack.c.h.b16 %v279
        %v500 = vunpack.c.l.b16 %v280
        %v501 = vunpack.c.h.b16 %v280
        %v502 = vunpack.c.l.b16 %v281
        %v503 = vunpack.c.h.b16 %v281
        %v504 = vunpack.c.l.b16 %v282
        %v505 = vunpack.c.h.b16 %v282
        %v506 = vunpack.c.l.b16 %v283
        %v507 = vunpack.c.h.b16 %v283
        %v508 = vunpack.c.l.b16 %v284
        %v509 = vunpack.c.h.b16 %v284
        %v510 = vunpack.c.l.b16 %v285
        %v511 = vunpack.c.h.b16 %v285
        %v512 = vunpack.c.l.b16 %v286
        %v513 = vunpack.c.h.b16 %v286
        %v514 = vunpack.c.l.b16 %v287
        %v515 = vunpack.c.h.b16 %v287
        %v516 = vunpack.c.l.b16 %v288
        %v517 = vunpack.c.h.b16 %v288
        %v518 = vunpack.c.l.b16 %v289
        %v519 = vunpack.c.h.b16 %v289
        %v520 = vunpack.c.l.b16 %v290
        %v521 = vunpack.c.h.b16 %v290
        %v522 = vunpack.c.l.b16 %v291
        %v523 = vunpack.c.h.b16 %v291
        %v524 = vunpack.c.l.b16 %v292
        %v525 = vunpack.c.h.b16 %v292
        %v526 = vunpack.c.l.b16 %v293
        %v527 = vunpack.c.h.b16 %v293
        %v528 = vunpack.c.l.b16 %v294
        %v529 = vunpack.c.h.b16 %v294
        %v530 = vunpack.c.l.b16 %v295
        %v531 = vunpack.c.h.b16 %v295
        %v532 = vunpack.c.l.b16 %v296
        %v533 = vunpack.c.h.b16 %v296
        %v534 = vunpack.c.l.b16 %v297
        %v535 = vunpack.c.h.b16 %v297
        %v536 = vunpack.c.l.b16 %v298
        %v537 = vunpack.c.h.b16 %v298
        %v538 = vunpack.c.l.b16 %v299
        %v539 = vunpack.c.h.b16 %v299
        %v540 = vunpack.c.l.b16 %v300
        %v541 = vunpack.c.h.b16 %v300
        %v542 = vunpack.c.l.b16 %v301
        %v543 = vunpack.c.h.b16 %v301
        %v544 = vunpack.c.l.b16 %v302
        %v545 = vunpack.c.h.b16 %v302
        %v546 = vunpack.c.l.b16 %v303
        %v547 = vunpack.c.h.b16 %v303
        %v548 = vunpack.c.l.b16 %v304
        %v549 = vunpack.c.h.b16 %v304
        %v550 = vunpack.c.l.b16 %v305
        %v551 = vunpack.c.h.b16 %v305
        %v552 = vunpack.c.l.b16 %v306
        %v553 = vunpack.c.h.b16 %v306
        %v554 = vunpack.c.l.b16 %v307
        %v555 = vunpack.c.h.b16 %v307
        %v556 = vunpack.c.l.b16 %v308
        %v557 = vunpack.c.h.b16 %v308
        %v558 = vunpack.c.l.b16 %v309
        %v559 = vunpack.c.h.b16 %v309
        %v560 = vunpack.c.l.b16 %v310
        %v561 = vunpack.c.h.b16 %v310
        %v562 = vunpack.c.l.b16 %v311
        %v563 = vunpack.c.h.b16 %v311
        %v564 = vunpack.c.l.b16 %v312
        %v565 = vunpack.c.h.b16 %v312
        %v566 = vunpack.c.l.b16 %v313
        %v567 = vunpack.c.h.b16 %v313
        %v568 = vunpack.c.l.b16 %v314
        %v569 = vunpack.c.h.b16 %v314
        %v570 = vunpack.c.l.b16 %v315
        %v571 = vunpack.c.h.b16 %v315
        %v572 = vunpack.c.l.b16 %v316
        %v573 = vunpack.c.h.b16 %v316
        %v574 = vunpack.c.l.b16 %v317
        %v575 = vunpack.c.h.b16 %v317
        %v576 = vunpack.c.l.b16 %v318
        %v577 = vunpack.c.h.b16 %v318
        %v578 = vunpack.c.l.b16 %v319
        %v579 = vunpack.c.h.b16 %v319
        %v580 = vunpack.c.l.b16 %v320
        %v581 = vunpack.c.h.b16 %v320
        %v582 = vunpack.c.l.b16 %v321
        %v583 = vunpack.c.h.b16 %v321
        %v584 = vunpack.c.l.b16 %v322
        %v585 = vunpack.c.h.b16 %v322
        %v586 = vunpack.c.l.b16 %v323
        %v587 = vunpack.c.h.b16 %v323
        %v588 = vunpack.c.l.b16 %v324
        %v589 = vunpack.c.h.b16 %v324
        %v590 = vunpack.c.l.b16 %v325
        %v591 = vunpack.c.h.b16 %v325
        %v592 = vunpack.c.l.b16 %v326
        %v593 = vunpack.c.h.b16 %v326
        %v594 = vunpack.c.l.b16 %v327
        %v595 = vunpack.c.h.b16 %v327
        %v596 = vunpack.c.l.b16 %v328
        %v597 = vunpack.c.h.b16 %v328
        %v598 = vunpack.c.l.b16 %v329
        %v599 = vunpack.c.h.b16 %v329
        %v600 = vunpack.c.l.b16 %v330
        %v601 = vunpack.c.h.b16 %v330
        %v602 = vunpack.c.l.b16 %v331
        %v603 = vunpack.c.h.b16 %v331
        %v604 = vunpack.c.l.b16 %v332
        %v605 = vunpack.c.h.b16 %v332
        %v606 = vunpack.c.l.b16 %v333
        %v607 = vunpack.c.h.b16 %v333
        %v608 = vunpack.c.l.b16 %v334
        %v609 = vunpack.c.h.b16 %v334
        %v610 = vunpack.c.l.b16 %v335
        %v611 = vunpack.c.h.b16 %v335
        %v612 = vunpack.c.l.b16 %v336
        %v613 = vunpack.c.h.b16 %v336
        %v614 = vunpack.c.l.b16 %v337
        %v615 = vunpack.c.h.b16 %v337
        %v616 = vunpack.c.l.b16 %v338
        %v617 = vunpack.c.h.b16 %v338
        %v618 = vunpack.c.l.b16 %v339
        %v619 = vunpack.c.h.b16 %v339
        %v620 = vunpack.c.l.b16 %v340
        %v621 = vunpack.c.h.b16 %v340
        %v622 = vunpack.c.l.b16 %v341
        %v623 = vunpack.c.h.b16 %v341
        %v624 = vunpack.c.l.b16 %v342
        %v625 = vunpack.c.h.b16 %v342
        %v626 = vunpack.c.l.b16 %v343
        %v627 = vunpack.c.h.b16 %v343
        %v628 = vunpack.c.l.b16 %v344
        %v629 = vunpack.c.h.b16 %v344
        %v630 = vunpack.c.l.b16 %v345
        %v631 = vunpack.c.h.b16 %v345
        %v632 = vunpack.c.l.b16 %v346
        %v633 = vunpack.c.h.b16 %v346
        %v634 = vunpack.c.l.b16 %v347
        %v635 = vunpack.c.h.b16 %v347
        %v636 = vunpack.c.l.b16 %v348
        %v637 = vunpack.c.h.b16 %v348
        %v638 = vunpack.c.l.b16 %v349
        %v639 = vunpack.c.h.b16 %v349
        %v640 = vunpack.c.l.b16 %v350
        %v641 = vunpack.c.h.b16 %v350
        %v642 = vunpack.c.l.b16 %v351
        %v643 = vunpack.c.h.b16 %v351
        %v644 = vunpack.c.l.b16 %v352
        %v645 = vunpack.c.h.b16 %v352
        %v646 = vunpack.c.l.b16 %v353
        %v647 = vunpack.c.h.b16 %v353
        %v648 = vunpack.c.l.b16 %v354
        %v649 = vunpack.c.h.b16 %v354
        %v650 = vunpack.c.l.b16 %v355
        %v651 = vunpack.c.h.b16 %v355
        %v652 = vunpack.c.l.b16 %v356
        %v653 = vunpack.c.h.b16 %v356
        %v654 = vunpack.c.l.b16 %v357
        %v655 = vunpack.c.h.b16 %v357
        %v656 = vunpack.c.l.b16 %v358
        %v657 = vunpack.c.h.b16 %v358
        %v658 = vunpack.c.l.b16 %v359
        %v659 = vunpack.c.h.b16 %v359
        %v660 = vunpack.c.l.b16 %v360
        %v661 = vunpack.c.h.b16 %v360
        %v662 = vunpack.c.l.b16 %v361
        %v663 = vunpack.c.h.b16 %v361
        %v664 = vpack.c.b16 %v478, %v472
        %v665 = vpack.c.b16 %v479, %v473
        %v666 = vpack.c.b16 %v480, %v474
        %v667 = vpack.c.b16 %v481, %v475
        %v668 = vpack.c.b16 %v482, %v476
        %v669 = vpack.c.b16 %v483, %v477
        %v670 = vpack.c.b16 %v490, %v484
        %v671 = vpack.c.b16 %v491, %v485
        %v672 = vpack.c.b16 %v492, %v486
        %v673 = vpack.c.b16 %v493, %v487
        %v674 = vpack.c.b16 %v494, %v488
        %v675 = vpack.c.b16 %v495, %v489
        %v676 = vpack.c.b16 %v502, %v496
        %v677 = vpack.c.b16 %v503, %v497
        %v678 = vpack.c.b16 %v504, %v498
        %v679 = vpack.c.b16 %v505, %v499
        %v680 = vpack.c.b16 %v506, %v500
        %v681 = vpack.c.b16 %v507, %v501
        %v682 = vpack.c.b16 %v514, %v508
        %v683 = vpack.c.b16 %v515, %v509
        %v684 = vpack.c.b16 %v516, %v510
        %v685 = vpack.c.b16 %v517, %v511
        %v686 = vpack.c.b16 %v518, %v512
        %v687 = vpack.c.b16 %v519, %v513
        %v688 = vpack.c.b16 %v526, %v520
        %v689 = vpack.c.b16 %v527, %v521
        %v690 = vpack.c.b16 %v528, %v522
        %v691 = vpack.c.b16 %v529, %v523
        %v692 = vpack.c.b16 %v530, %v524
        %v693 = vpack.c.b16 %v531, %v525
        %v694 = vpack.c.b16 %v538, %v532
        %v695 = vpack.c.b16 %v539, %v533
        %v696 = vpack.c.b16 %v540, %v534
        %v697 = vpack.c.b16 %v541, %v535
        %v698 = vpack.c.b16 %v542, %v536
        %v699 = vpack.c.b16 %v543, %v537
        %v700 = vpack.c.b16 %v550, %v544
        %v701 = vpack.c.b16 %v551, %v545
        %v702 = vpack.c.b16 %v552, %v546
        %v703 = vpack.c.b16 %v553, %v547
        %v704 = vpack.c.b16 %v554, %v548
        %v705 = vpack.c.b16 %v555, %v549
        %v706 = vpack.c.b16 %v562, %v556
        %v707 = vpack.c.b16 %v563, %v557
        %v708 = vpack.c.b16 %v564, %v558
        %v709 = vpack.c.b16 %v565, %v559
        %v710 = vpack.c.b16 %v566, %v560
        %v711 = vpack.c.b16 %v567, %v561
        %v712 = vpack.c.b16 %v574, %v568
        %v713 = vpack.c.b16 %v575, %v569
        %v714 = vpack.c.b16 %v576, %v570
        %v715 = vpack.c.b16 %v577, %v571
        %v716 = vpack.c.b16 %v578, %v572
        %v717 = vpack.c.b16 %v579, %v573
        %v718 = vpack.c.b16 %v586, %v580
        %v719 = vpack.c.b16 %v587, %v581
        %v720 = vpack.c.b16 %v588, %v582
        %v721 = vpack.c.b16 %v589, %v583
        %v722 = vpack.c.b16 %v590, %v584
        %v723 = vpack.c.b16 %v591, %v585
        %v724 = vpack.c.b16 %v598, %v592
        %v725 = vpack.c.b16 %v599, %v593
        %v726 = vpack.c.b16 %v600, %v594
        %v727 = vpack.c.b16 %v601, %v595
        %v728 = vpack.c.b16 %v602, %v596
        %v729 = vpack.c.b16 %v603, %v597
        %v730 = vpack.c.b16 %v610, %v604
        %v731 = vpack.c.b16 %v611, %v605
        %v732 = vpack.c.b16 %v612, %v606
        %v733 = vpack.c.b16 %v613, %v607
        %v734 = vpack.c.b16 %v614, %v608
        %v735 = vpack.c.b16 %v615, %v609
        %v736 = vpack.c.b16 %v622, %v616
        %v737 = vpack.c.b16 %v623, %v617
        %v738 = vpack.c.b16 %v624, %v618
        %v739 = vpack.c.b16 %v625, %v619
        %v740 = vpack.c.b16 %v626, %v620
        %v741 = vpack.c.b16 %v627, %v621
        %v742 = vpack.c.b16 %v634, %v628
        %v743 = vpack.c.b16 %v635, %v629
        %v744 = vpack.c.b16 %v636, %v630
        %v745 = vpack.c.b16 %v637, %v631
        %v746 = vpack.c.b16 %v638, %v632
        %v747 = vpack.c.b16 %v639, %v633
        %v748 = vpack.c.b16 %v646, %v640
        %v749 = vpack.c.b16 %v647, %v641
        %v750 = vpack.c.b16 %v648, %v642
        %v751 = vpack.c.b16 %v649, %v643
        %v752 = vpack.c.b16 %v650, %v644
        %v753 = vpack.c.b16 %v651, %v645
        %v754 = vpack.c.b16 %v658, %v652
        %v755 = vpack.c.b16 %v659, %v653
        %v756 = vpack.c.b16 %v660, %v654
        %v757 = vpack.c.b16 %v661, %v655
        %v758 = vpack.c.b16 %v662, %v656
        %v759 = vpack.c.b16 %v663, %v657
        %856 = vmatpush.bf16.msra.mxu0 %v706
        %857 = vmatpush.bf16.msra.mxu0 %v700
        %858 = vmatpush.bf16.msra.mxu0 %v694
        %859 = vmatpush.bf16.msra.mxu0 %v688
        %860 = vmatpush.bf16.msra.mxu0 %v682
        %861 = vmatpush.bf16.msra.mxu0 %v676
        %862 = vmatpush.bf16.msra.mxu0 %v670
        %863 = vmatpush.bf16.msra.mxu0 %v664
        %864 = vmatmul.bf16.gmra.mxu0 %v264
        %v865 = vpop.f32.mrf.mxu0
        %v866 = vadd.f32 %v364, %v865
        %v867 = vpop.f32.mrf.mxu0
        %868 = vdwg.mxu0
        %869 = vmatpush.bf16.msra.mxu0 %v754
        %870 = vmatpush.bf16.msra.mxu0 %v748
        %871 = vmatpush.bf16.msra.mxu0 %v742
        %872 = vmatpush.bf16.msra.mxu0 %v736
        %873 = vmatpush.bf16.msra.mxu0 %v730
        %874 = vmatpush.bf16.msra.mxu0 %v724
        %875 = vmatpush.bf16.msra.mxu0 %v718
        %876 = vmatpush.bf16.msra.mxu0 %v712
        %877 = vmatmul.bf16.gmra.mxu0 %v265
        %v878 = vpop.f32.mrf.mxu0
        %v879 = vadd.f32 %v866, %v878
        %v880 = vpop.f32.mrf.mxu0
        %881 = vdwg.mxu0
        %882 = vmatpush.bf16.msra.mxu0 %v707
        %883 = vmatpush.bf16.msra.mxu0 %v701
        %884 = vmatpush.bf16.msra.mxu0 %v695
        %885 = vmatpush.bf16.msra.mxu0 %v689
        %886 = vmatpush.bf16.msra.mxu0 %v683
        %887 = vmatpush.bf16.msra.mxu0 %v677
        %888 = vmatpush.bf16.msra.mxu0 %v671
        %889 = vmatpush.bf16.msra.mxu0 %v665
        %890 = vmatmul.bf16.gmra.mxu0 %v264
        %v891 = vpop.f32.mrf.mxu0
        %v892 = vadd.f32 %v365, %v891
        %v893 = vpop.f32.mrf.mxu0
        %894 = vdwg.mxu0
        %895 = vmatpush.bf16.msra.mxu0 %v755
        %896 = vmatpush.bf16.msra.mxu0 %v749
        %897 = vmatpush.bf16.msra.mxu0 %v743
        %898 = vmatpush.bf16.msra.mxu0 %v737
        %899 = vmatpush.bf16.msra.mxu0 %v731
        %900 = vmatpush.bf16.msra.mxu0 %v725
        %901 = vmatpush.bf16.msra.mxu0 %v719
        %902 = vmatpush.bf16.msra.mxu0 %v713
        %903 = vmatmul.bf16.gmra.mxu0 %v265
        %v904 = vpop.f32.mrf.mxu0
        %v905 = vadd.f32 %v892, %v904
        %v906 = vpop.f32.mrf.mxu0
        %907 = vdwg.mxu0
        %908 = vmatpush.bf16.msra.mxu0 %v708
        %909 = vmatpush.bf16.msra.mxu0 %v702
        %910 = vmatpush.bf16.msra.mxu0 %v696
        %911 = vmatpush.bf16.msra.mxu0 %v690
        %912 = vmatpush.bf16.msra.mxu0 %v684
        %913 = vmatpush.bf16.msra.mxu0 %v678
        %914 = vmatpush.bf16.msra.mxu0 %v672
        %915 = vmatpush.bf16.msra.mxu0 %v666
        %916 = vmatmul.bf16.gmra.mxu0 %v264
        %v917 = vpop.f32.mrf.mxu0
        %v918 = vadd.f32 %v366, %v917
        %v919 = vpop.f32.mrf.mxu0
        %920 = vdwg.mxu0
        %921 = vmatpush.bf16.msra.mxu0 %v756
        %922 = vmatpush.bf16.msra.mxu0 %v750
        %923 = vmatpush.bf16.msra.mxu0 %v744
        %924 = vmatpush.bf16.msra.mxu0 %v738
        %925 = vmatpush.bf16.msra.mxu0 %v732
        %926 = vmatpush.bf16.msra.mxu0 %v726
        %927 = vmatpush.bf16.msra.mxu0 %v720
        %928 = vmatpush.bf16.msra.mxu0 %v714
        %929 = vmatmul.bf16.gmra.mxu0 %v265
        %v930 = vpop.f32.mrf.mxu0
        %v931 = vadd.f32 %v918, %v930
        %v932 = vpop.f32.mrf.mxu0
        %933 = vdwg.mxu0
        %934 = vmatpush.bf16.msra.mxu0 %v709
        %935 = vmatpush.bf16.msra.mxu0 %v703
        %936 = vmatpush.bf16.msra.mxu0 %v697
        %937 = vmatpush.bf16.msra.mxu0 %v691
        %938 = vmatpush.bf16.msra.mxu0 %v685
        %939 = vmatpush.bf16.msra.mxu0 %v679
        %940 = vmatpush.bf16.msra.mxu0 %v673
        %941 = vmatpush.bf16.msra.mxu0 %v667
        %942 = vmatmul.bf16.gmra.mxu0 %v264
        %v943 = vpop.f32.mrf.mxu0
        %v944 = vadd.f32 %v367, %v943
        %v945 = vpop.f32.mrf.mxu0
        %946 = vdwg.mxu0
        %947 = vmatpush.bf16.msra.mxu0 %v757
        %948 = vmatpush.bf16.msra.mxu0 %v751
        %949 = vmatpush.bf16.msra.mxu0 %v745
        %950 = vmatpush.bf16.msra.mxu0 %v739
        %951 = vmatpush.bf16.msra.mxu0 %v733
        %952 = vmatpush.bf16.msra.mxu0 %v727
        %953 = vmatpush.bf16.msra.mxu0 %v721
        %954 = vmatpush.bf16.msra.mxu0 %v715
        %955 = vmatmul.bf16.gmra.mxu0 %v265
        %v956 = vpop.f32.mrf.mxu0
        %v957 = vadd.f32 %v944, %v956
        %v958 = vpop.f32.mrf.mxu0
        %959 = vdwg.mxu0
        %960 = vmatpush.bf16.msra.mxu0 %v710
        %961 = vmatpush.bf16.msra.mxu0 %v704
        %962 = vmatpush.bf16.msra.mxu0 %v698
        %963 = vmatpush.bf16.msra.mxu0 %v692
        %964 = vmatpush.bf16.msra.mxu0 %v686
        %965 = vmatpush.bf16.msra.mxu0 %v680
        %966 = vmatpush.bf16.msra.mxu0 %v674
        %967 = vmatpush.bf16.msra.mxu0 %v668
        %968 = vmatmul.bf16.gmra.mxu0 %v264
        %v969 = vpop.f32.mrf.mxu0
        %v970 = vadd.f32 %v368, %v969
        %v971 = vpop.f32.mrf.mxu0
        %972 = vdwg.mxu0
        %973 = vmatpush.bf16.msra.mxu0 %v758
        %974 = vmatpush.bf16.msra.mxu0 %v752
        %975 = vmatpush.bf16.msra.mxu0 %v746
        %976 = vmatpush.bf16.msra.mxu0 %v740
        %977 = vmatpush.bf16.msra.mxu0 %v734
        %978 = vmatpush.bf16.msra.mxu0 %v728
        %979 = vmatpush.bf16.msra.mxu0 %v722
        %980 = vmatpush.bf16.msra.mxu0 %v716
        %981 = vmatmul.bf16.gmra.mxu0 %v265
        %v982 = vpop.f32.mrf.mxu0
        %v983 = vadd.f32 %v970, %v982
        %v984 = vpop.f32.mrf.mxu0
        %985 = vdwg.mxu0
        %986 = vmatpush.bf16.msra.mxu0 %v711
        %987 = vmatpush.bf16.msra.mxu0 %v705
        %988 = vmatpush.bf16.msra.mxu0 %v699
        %989 = vmatpush.bf16.msra.mxu0 %v693
        %990 = vmatpush.bf16.msra.mxu0 %v687
        %991 = vmatpush.bf16.msra.mxu0 %v681
        %992 = vmatpush.bf16.msra.mxu0 %v675
        %993 = vmatpush.bf16.msra.mxu0 %v669
        %994 = vmatmul.bf16.gmra.mxu0 %v264
        %v995 = vpop.f32.mrf.mxu0
        %v996 = vadd.f32 %v369, %v995
        %v997 = vpop.f32.mrf.mxu0
        %998 = vdwg.mxu0
        %999 = vmatpush.bf16.msra.mxu0 %v759
        %1000 = vmatpush.bf16.msra.mxu0 %v753
        %1001 = vmatpush.bf16.msra.mxu0 %v747
        %1002 = vmatpush.bf16.msra.mxu0 %v741
        %1003 = vmatpush.bf16.msra.mxu0 %v735
        %1004 = vmatpush.bf16.msra.mxu0 %v729
        %1005 = vmatpush.bf16.msra.mxu0 %v723
        %1006 = vmatpush.bf16.msra.mxu0 %v717
        %1007 = vmatmul.bf16.gmra.mxu0 %v265
        %v1008 = vpop.f32.mrf.mxu0
        %v1009 = vadd.f32 %v996, %v1008
        %v1010 = vpop.f32.mrf.mxu0
        %1011 = vdwg.mxu0
        %v1012 = vld [vmem:[#allocation8] sm:$0xff]
        %v1013 = vld [vmem:[#allocation8 + $0x8] sm:$0xff]
        %v1014 = vld [vmem:[#allocation8 + $0x10] sm:$0xff]
        %v1015 = vld [vmem:[#allocation8 + $0x18] sm:$0xff]
        %v1016 = vld [vmem:[#allocation8 + $0x20] sm:$0xff]
        %v1017 = vld [vmem:[#allocation8 + $0x28] sm:$0xff]
        %v1018 = vadd.f32 %v879, %v1012
        %v1019 = vadd.f32 %v905, %v1013
        %v1020 = vadd.f32 %v931, %v1014
        %v1021 = vadd.f32 %v957, %v1015
        %v1022 = vadd.f32 %v983, %v1016
        %v1023 = vadd.f32 %v1009, %v1017
        %1024 = vst [vmem:[%s261] sm:$0xff] %v1018
        %1025 = vst [vmem:[%s261 + $0x8] sm:$0xff] %v1019
        %1026 = vst [vmem:[%s261 + $0x10] sm:$0xff] %v1020
        %1027 = vst [vmem:[%s261 + $0x18] sm:$0xff] %v1021
        %1028 = vst [vmem:[%s261 + $0x20] sm:$0xff] %v1022
        %1029 = vst [vmem:[%s261 + $0x28] sm:$0xff] %v1023
        %s1030 = sand.u32 %s120, 1
        %s1031 = scalar_lea.sflag [#allocation4], %s1030
        %s1032 = sand.u32 %s120, 1
        %s1033 = smul.addr %s1032, 48
        %s1034 = scalar_lea.vmem [#allocation10], %s1033
        // Predicated region
        $region53: #{tpu_custom_call.1} parent=35 // pred_check
          %p1035 = pneg %p130
        $region54: #{tpu_custom_call.1} parent=35 // pred_check_branch
          %1037 = sbr.rel (%p1035) target = $region56
        $region55: #{tpu_custom_call.1} parent=35 // pred_region
          %1039 = vsyncadd %s1031, 0
          %s1040 = smul.addr %s23, 6
          %s1041 = smul.addr %s1040, 8
          %s1042 = scalar_lea.hbm %s4, %s1041
          %s1044 = sshll.u32 %s1034, 4
          %s1045 = int_to_ptr.vmem [resolvable:$true] %s1044
          %s1046 = sshll.u32 %s1042, 4
          %s1047 = int_to_ptr.hbm [resolvable:$true] %s1046
          %1049 = dma.vmem_to_hbm [thread:$0]  %s1045, 768, %s1047, %s1031
        $region56: #{tpu_custom_call.1} parent=35 // pred_fallthru
          _
      $region36: #{tpu_custom_call.1} parent=5 // pred_fallthru
        _
      %p1050 = scmp.le.s32.totalorder 2, %s18
      // Predicated region
      $region57: #{tpu_custom_call.1} parent=5 // pred_check
        %p1051 = pneg %p1050
      $region58: #{tpu_custom_call.1} parent=5 // pred_check_branch
        %1053 = sbr.rel (%p1051) target = $region60
      $region59: #{tpu_custom_call.1} parent=5 // pred_region
        %s1054 = ssub.s32 %s18, 2
        // Predicated region
        $region61: #{tpu_custom_call.1} parent=59 // pred_check
          %p1055 = pneg %p136
        $region62: #{tpu_custom_call.1} parent=59 // pred_check_branch
          %1057 = sbr.rel (%p1055) target = $region64
        $region63: #{tpu_custom_call.1} parent=59 // pred_region
          %s1058 = sand.u32 %s121, 1
          %s1059 = scalar_lea.sflag [#allocation4], %s1058
          %s1060 = sand.u32 %s121, 1
          %s1061 = smul.addr %s1060, 48
          %s1062 = scalar_lea.vmem [#allocation10], %s1061
          %1064 = dma.done %s1059, 768
        $region64: #{tpu_custom_call.1} parent=59 // pred_fallthru
          _
      $region60: #{tpu_custom_call.1} parent=5 // pred_fallthru
        _
    $region6: #{tpu_custom_call.1} parent=1 // loop_footer
      %s22 = sadd.s32 1, %s18
    $region7: #{tpu_custom_call.1} parent=1 // loop_footer_branch
      %17 = sbr.rel target = $region3
    $region8: #{tpu_custom_call.1} parent=1 // loop_exit
      _
    %1065 = vsyncpa [#allocation3], 1
    %s1066 = scalar_lea.sflag [#allocation3], 1
    %1067 = vsyncpa %s1066, 1
    %1068 = vsyncpa [#allocation6], 1
    %1069 = vsyncpa [#allocation9], 1
    %1070 = vsyncpa [#allocation4], 1
    %s1071 = scalar_lea.sflag [#allocation4], 1
    %1072 = vsyncpa %s1071, 1

</llo_original>
